<compile_context>
chip_gen: v6e
topology: v6e:2x2x1
jax: 0.10.0
libtpu: 0.0.40
codegen_flags: <defaults>
</compile_context>

<pallas_src>
import jax
import jax.numpy as jnp
from jax.experimental import pallas as pl
from jax.experimental.pallas import tpu as pltpu


def temp_scale_head_kernel(temp_ref, x_ref, w_ref, b_ref, o_ref, acc_ref):
    # temp_ref: SMEM (1,1) f32            -- the nn.Parameter temperature
    # x_ref:    VMEM [TM, TK] bf16        -- flattened input tile
    # w_ref:    VMEM [TK, NPAD] bf16      -- classifier weight tile
    # b_ref:    VMEM [1, NPAD] f32        -- classifier bias (zero-padded)
    # o_ref:    VMEM [TM, NPAD] f32       -- temperature-scaled logits tile
    # acc_ref:  VMEM [TM, NPAD] f32       -- K-reduction accumulator (persists over k)
    k = pl.program_id(1)

    @pl.when(k == 0)
    def _init():
        acc_ref[...] = jnp.zeros_like(acc_ref)

    acc_ref[...] += jnp.dot(
        x_ref[...], w_ref[...], preferred_element_type=jnp.float32
    )

    @pl.when(k == pl.num_programs(1) - 1)
    def _finalize():
        # Epilogue runs once per output tile (not once per K step):
        # bias add + logits / temperature, all in f32.
        inv_t = 1.0 / temp_ref[0, 0]
        o_ref[...] = ((acc_ref[...] + b_ref[...]) * inv_t).astype(o_ref.dtype)


def _pad_axis(arr, multiple, axis):
    size = arr.shape[axis]
    pad = (-size) % multiple
    if pad == 0:
        return arr
    widths = [(0, 0)] * arr.ndim
    widths[axis] = (0, pad)
    return jnp.pad(arr, widths)


def model_with_temperature_forward(x_nchw, w, b, temperature, *, tm=128, tk=512):
    """Forward pass: synthetic backbone (linear head) + temperature scaling."""
    B = x_nchw.shape[0]
    F, num_classes = w.shape

    # Flatten NCHW -> [B, F]; feed the MXU bf16 inputs, accumulate in f32.
    x_flat = x_nchw.reshape(B, F).astype(jnp.bfloat16)
    w_bf = w.astype(jnp.bfloat16)

    # Lane-dense padded class dim (multiple of 128, at least 128).
    n_pad = max(128, pl.cdiv(num_classes, 128) * 128)
    # Keep TK no larger than the (padded) feature dim.
    tk = min(tk, pl.cdiv(F, 128) * 128)

    # Zero-pad: batch -> multiple of tm, features -> multiple of tk, classes -> n_pad.
    x_p = _pad_axis(_pad_axis(x_flat, tm, 0), tk, 1)
    w_p = _pad_axis(_pad_axis(w_bf, tk, 0), n_pad, 1)
    b_p = _pad_axis(b.reshape(1, num_classes).astype(jnp.float32), n_pad, 1)
    temp = jnp.asarray(temperature, jnp.float32).reshape(1, 1)

    b_pad_rows, f_pad = x_p.shape
    grid = (b_pad_rows // tm, f_pad // tk)

    out = pl.pallas_call(
        temp_scale_head_kernel,
        out_shape=jax.ShapeDtypeStruct((b_pad_rows, n_pad), jnp.float32),
        grid_spec=pltpu.PrefetchScalarGridSpec(
            num_scalar_prefetch=0,
            grid=grid,
            in_specs=[
                # temperature scalar lives in SMEM, untiled.
                pl.BlockSpec(memory_space=pltpu.MemorySpace.SMEM),
                # x: stream [tm, tk] tiles over (batch, K).
                pl.BlockSpec((tm, tk), lambda i, k: (i, k)),
                # W: stream [tk, n_pad] tiles over K; reused across batch tiles.
                pl.BlockSpec((tk, n_pad), lambda i, k: (k, 0)),
                # bias: single lane-dense row, constant across the grid.
                pl.BlockSpec((1, n_pad), lambda i, k: (0, 0)),
            ],
            # Output tile is revisited across the K axis (accumulator pattern).
            out_specs=pl.BlockSpec((tm, n_pad), lambda i, k: (i, 0)),
            scratch_shapes=[pltpu.VMEM((tm, n_pad), jnp.float32)],
        ),
        compiler_params=pltpu.CompilerParams(
            dimension_semantics=("parallel", "arbitrary"),
            vmem_limit_bytes=32 * 1024 * 1024,
        ),
    )(temp, x_p, w_p, b_p)

    # Slice padding back off: [B, num_classes] scaled logits.
    return out[:B, :num_classes]


if __name__ == "__main__":
    key = jax.random.PRNGKey(0)
    kx, kw, kb = jax.random.split(key, 3)

    # Small shapes consistent with an image-classifier forward pass (NCHW, as in PyTorch).
    B, C, H, W = 2, 4, 16, 16
    F = C * H * W                      # flattened feature dim = 1024
    num_classes = 10

    x = jax.random.normal(kx, (B, C, H, W), dtype=jnp.float32)
    w = jax.random.normal(kw, (F, num_classes), dtype=jnp.float32) * 0.02
    b = jax.random.normal(kb, (num_classes,), dtype=jnp.float32) * 0.01

    # nn.Parameter(torch.ones(1) * 1.0) -> deterministic init; use a non-trivial value
    # so the divide is actually exercised.
    temperature = jnp.ones((1,), dtype=jnp.float32) * 1.5

    out = model_with_temperature_forward(x, w, b, temperature)
    out = jax.block_until_ready(out)

    # Reference (plain JAX): same bf16 input quantization, f32 accumulation,
    # then logits / temperature (broadcast over classes).
    x_q = x.reshape(B, F).astype(jnp.bfloat16).astype(jnp.float32)
    w_q = w.astype(jnp.bfloat16).astype(jnp.float32)
    ref = (x_q @ w_q + b) / temperature[0]

    assert out.shape == (B, num_classes)
    assert jnp.allclose(out, ref, atol=5e-3, rtol=5e-3)

    print("KERNEL_OK")
</pallas_src>

<mosaic_0001>
module attributes {stable_mosaic.version = 11 : i64} {
  func.func @temp_scale_head_kernel(%arg0: i32, %arg1: i32, %arg2: memref<1x1xf32, #tpu.memory_space<smem>>, %arg3: memref<128x512xbf16, #tpu.memory_space<vmem>>, %arg4: memref<512x128xbf16, #tpu.memory_space<vmem>>, %arg5: memref<1x128xf32, #tpu.memory_space<vmem>>, %arg6: memref<128x128xf32, #tpu.memory_space<vmem>>, %arg7: memref<128x128xf32, #tpu.memory_space<vmem>>) attributes {dimension_semantics = [#tpu.dimension_semantics<parallel>, #tpu.dimension_semantics<arbitrary>], iteration_bounds = array<i64: 1, 2>, scalar_prefetch = 0 : i64, scratch_operands = 1 : i64, tpu.core_type = #tpu.core_type<tc>, window_params = [{transform_indices = @transform_0, window_bounds = array<i64: 1, 1>}, {transform_indices = @transform_1, window_bounds = array<i64: 128, 512>}, {transform_indices = @transform_2, window_bounds = array<i64: 512, 128>}, {pipeline_mode = #tpu.pipeline_mode<synchronous>, transform_indices = @transform_3, window_bounds = array<i64: 1, 128>}, {transform_indices = @transform_4, window_bounds = array<i64: 128, 128>}]} {
    %c0_i32 = arith.constant 0 : i32
    %0 = arith.cmpi eq, %arg1, %c0_i32 : i32
    %1 = arith.extui %0 : i1 to i32
    %c0_i32_0 = arith.constant 0 : i32
    %2 = arith.cmpi ne, %1, %c0_i32_0 : i32
    scf.if %2 {
      %cst_9 = arith.constant 0.000000e+00 : f32
      %12 = vector.broadcast %cst_9 : f32 to vector<128x128xf32>
      %c0_10 = arith.constant 0 : index
      %c0_11 = arith.constant 0 : index
      %13 = vector.load %arg7[%c0_10, %c0_11] : memref<128x128xf32, #tpu.memory_space<vmem>>, vector<128x128xf32>
      tpu.vector_store %arg7[%c0_10, %c0_11], %12 {strides = array<i32>} : memref<128x128xf32, #tpu.memory_space<vmem>>, vector<128x128xf32>,
    } else {
    }
    %c0 = arith.constant 0 : index
    %c0_1 = arith.constant 0 : index
    %3 = vector.load %arg7[%c0, %c0_1] : memref<128x128xf32, #tpu.memory_space<vmem>>, vector<128x128xf32>
    %c0_2 = arith.constant 0 : index
    %c0_3 = arith.constant 0 : index
    %4 = vector.load %arg3[%c0_2, %c0_3] : memref<128x512xbf16, #tpu.memory_space<vmem>>, vector<128x512xbf16>
    %c0_4 = arith.constant 0 : index
    %c0_5 = arith.constant 0 : index
    %5 = vector.load %arg4[%c0_4, %c0_5] : memref<512x128xbf16, #tpu.memory_space<vmem>>, vector<512x128xbf16>
    %cst = arith.constant dense<0.000000e+00> : vector<128x128xf32>
    %6 = tpu.matmul %4, %5, %cst {dimension_numbers = #tpu.dot_dimension_numbers<[1], [0], [0], [1], [0, 0, 1, 1], [], []>} : vector<128x512xbf16>, vector<512x128xbf16>, vector<128x128xf32> -> vector<128x128xf32>
    %7 = arith.addf %3, %6 : vector<128x128xf32>
    %c0_6 = arith.constant 0 : index
    %c0_7 = arith.constant 0 : index
    %8 = vector.load %arg7[%c0_6, %c0_7] : memref<128x128xf32, #tpu.memory_space<vmem>>, vector<128x128xf32>
    tpu.vector_store %arg7[%c0_6, %c0_7], %7 {strides = array<i32>} : memref<128x128xf32, #tpu.memory_space<vmem>>, vector<128x128xf32>,
    %c1_i32 = arith.constant 1 : i32
    %9 = arith.cmpi eq, %arg1, %c1_i32 : i32
    %10 = arith.extui %9 : i1 to i32
    %c0_i32_8 = arith.constant 0 : i32
    %11 = arith.cmpi ne, %10, %c0_i32_8 : i32
    scf.if %11 {
      %c0_9 = arith.constant 0 : index
      %c0_10 = arith.constant 0 : index
      %12 = memref.load %arg2[%c0_9, %c0_10] : memref<1x1xf32, #tpu.memory_space<smem>>
      %cst_11 = arith.constant 1.000000e+00 : f32
      %13 = arith.divf %cst_11, %12 : f32
      %c0_12 = arith.constant 0 : index
      %c0_13 = arith.constant 0 : index
      %14 = vector.load %arg7[%c0_12, %c0_13] : memref<128x128xf32, #tpu.memory_space<vmem>>, vector<128x128xf32>
      %c0_14 = arith.constant 0 : index
      %c0_15 = arith.constant 0 : index
      %15 = vector.load %arg5[%c0_14, %c0_15] : memref<1x128xf32, #tpu.memory_space<vmem>>, vector<1x128xf32>
      %16 = vector.broadcast %15 : vector<1x128xf32> to vector<128x128xf32>
      %17 = arith.addf %14, %16 : vector<128x128xf32>
      %18 = vector.broadcast %13 : f32 to vector<128x128xf32>
      %19 = arith.mulf %17, %18 : vector<128x128xf32>
      %c0_16 = arith.constant 0 : index
      %c0_17 = arith.constant 0 : index
      %20 = vector.load %arg6[%c0_16, %c0_17] : memref<128x128xf32, #tpu.memory_space<vmem>>, vector<128x128xf32>
      tpu.vector_store %arg6[%c0_16, %c0_17], %19 {strides = array<i32>} : memref<128x128xf32, #tpu.memory_space<vmem>>, vector<128x128xf32>,
    } else {
    }
    return
  }
  func.func @transform_0(%arg0: i32, %arg1: i32) -> (i32, i32) {
    %c0_i32 = arith.constant 0 : i32
    %c0_i32_0 = arith.constant 0 : i32
    %c0_i32_1 = arith.constant 0 : i32
    return %c0_i32, %c0_i32_0 : i32, i32
  }
  func.func @transform_1(%arg0: i32, %arg1: i32) -> (i32, i32) {
    %c0_i32 = arith.constant 0 : i32
    return %arg0, %arg1 : i32, i32
  }
  func.func @transform_2(%arg0: i32, %arg1: i32) -> (i32, i32) {
    %c0_i32 = arith.constant 0 : i32
    %c0_i32_0 = arith.constant 0 : i32
    return %arg1, %c0_i32 : i32, i32
  }
  func.func @transform_3(%arg0: i32, %arg1: i32) -> (i32, i32) {
    %c0_i32 = arith.constant 0 : i32
    %c0_i32_0 = arith.constant 0 : i32
    %c0_i32_1 = arith.constant 0 : i32
    return %c0_i32, %c0_i32_0 : i32, i32
  }
  func.func @transform_4(%arg0: i32, %arg1: i32) -> (i32, i32) {
    %c0_i32 = arith.constant 0 : i32
    %c0_i32_0 = arith.constant 0 : i32
    return %arg0, %c0_i32 : i32, i32
  }
}

</mosaic_0001>

<llo_original>
// kernel: tpu_custom_call.1
$region0: #{tpu_custom_call.1}
  #allocation0 [shape = 'u32[]', space=smem, size = 0x4, offset = 0x4, fixed_abs, tag = 'smem constant byte address 0x4 - core index']
  #allocation1 [shape = 'u32[144,128]{1,0:T(1,128)}', space=vmem, size = 0x12000, scoped, tag = 'internal scratch']
  #allocation2 [shape = 'f32[128,128]{1,0:T(8,128)}', space=vmem, size = 0x10000, scoped, tag = 'scratch operand']
  #allocation3 [shape = 'f32[1,1]{1,0:T(1,128)S(6)}', space=smem, size = 0x200, scoped, tag = 'scoped memory for tpu_custom_call.1']
  %s0 = inlined_call_operand.<no memory space> [shape: f32[1,1], index: 0, kind: input, shape index: {}]
  %s1 = inlined_call_operand.hbm [shape: bf16[128,1024], index: 1, kind: input, shape index: {}]
  %s2 = inlined_call_operand.hbm [shape: bf16[1024,128], index: 2, kind: input, shape index: {}]
  %s3 = inlined_call_operand.vmem [shape: f32[1,128], index: 3, kind: input, shape index: {}]
  %s4 = inlined_call_operand.hbm [shape: f32[128,128], index: 4, kind: output, shape index: {}]
  %s5 = sld [smem:[#allocation0]]
  $region65: #{tpu_custom_call.1} parent=0
    _
  %s7 = ssub.s32 1, %s5
  %s8 = scalar_select 0, %s7, %s5
  %9 = sst [smem:[#allocation3]] %s0
  $region1: #{tpu_custom_call.1} parent=0
    #allocation4 [shape = 'u8[262144]{0}', space=vmem, size = 0x40000, scoped, tag = 'input window, operand 1']
    #allocation5 [shape = 's32[2]{0}', space=sflag, size = 0x8, scoped, tag = 'scoped memory for tpu_custom_call.1']
    #allocation6 [shape = 's32[2]{0}', space=sflag, size = 0x8, scoped, tag = 'scoped memory for tpu_custom_call.1']
    #allocation7 [shape = 'u8[262144]{0}', space=vmem, size = 0x40000, scoped, tag = 'input window, operand 2']
    #allocation8 [shape = 's32[2]{0}', space=sflag, size = 0x8, scoped, tag = 'scoped memory for tpu_custom_call.1']
    #allocation9 [shape = 'u8[65536]{0}', space=vmem, size = 0x10000, scoped, tag = 'output window, operand 0, single buffered']
    %10 = vsyncpa [#allocation5], 0
    %s11 = scalar_lea.sflag [#allocation5], 1
    %12 = vsyncpa %s11, 0
    %13 = vsyncpa [#allocation8], 0
    %s14 = scalar_lea.sflag [#allocation8], 1
    %15 = vsyncpa %s14, 0
    %16 = vsyncpa [#allocation6], 0
    loop: start=0, step=1, limit=4
    $region2: #{tpu_custom_call.1} parent=1 // loop_pre_header
      _
    $region3: #{tpu_custom_call.1} parent=1 // loop_header
      %s18 = sphi 0, %s22
      %p19 = scmp.ge.s32.totalorder %s18, 4
      %s25 = sphi 0, %s37
      %s26 = sphi 0, %s33
      %s27 = sphi 0, %s25
      %s28 = sphi 0, %s26
      %s29 = sphi 0, %s27
      %s30 = sphi 0, %s28
      %s38 = sphi 0, %s38
      %s40 = sphi 0, %s38
      %s41 = sphi 0, %s40
      %s55 = sphi 0, %s41
      %s63 = sphi 0, %s65
      %s66 = sphi 0, %s63
      %s67 = sphi 0, %s66
      %s83 = sphi 0, %s67
      %s89 = sphi 0, %s91
      %s92 = sphi 0, %s89
      %s93 = sphi 0, %s92
      %s109 = sphi 0, %s93
      %s113 = sphi 0, %s113
      %s115 = sphi 0, %s113
      %s116 = sphi 0, %s115
      %s130 = sphi 0, %s116
      %s136 = sphi 0, %s138
      %s139 = sphi 0, %s136
      %s140 = sphi 0, %s139
      %s156 = sphi 0, %s140
    $region4: #{tpu_custom_call.1} parent=1 // loop_header_branch
      %21 = sbr.rel (%p19) target = $region8
    $region5: #{tpu_custom_call.1} parent=1 // loop_body
      %s23 = ssub.s32 %s18, 1
      %s24 = ssub.s32 %s18, 2
      %s31 = sadd.s32 1, %s26
      %p32 = scmp.ge.s32.totalorder %s31, 2
      %s33 = scalar_select %p32, 0, %s31
      %s34 = sadd.s32 1, %s25
      %s35 = scalar_select %p32, %s34, %s25
      %p36 = scmp.ge.s32.totalorder %s35, 1
      %s37 = scalar_select %p36, 0, %s35
      %s39 = sadd.s32 %s38, 1
      %p42 = scmp.eq.s32.totalorder %s18, 1
      %p43 = scmp.ne.s32.totalorder %s38, %s40
      %p44 = scmp.eq.s32.totalorder %s18, 0
      %p45 = por %p43, %p44
      %p46 = scmp.ne.s32.totalorder %s38, %s40
      %p47 = scmp.eq.s32.totalorder %s23, 1
      %p48 = por %p46, %p47
      %p49 = scmp.ne.s32.totalorder %s40, %s41
      %p50 = scmp.eq.s32.totalorder %s23, 0
      %p51 = por %p49, %p50
      %p52 = scmp.ne.s32.totalorder %s40, %s41
      %p53 = scmp.eq.s32.totalorder %s24, 1
      %p54 = por %p52, %p53
      %p56 = scmp.ne.s32.totalorder %s41, %s55
      %p57 = scmp.eq.s32.totalorder %s24, 0
      %p58 = por %p56, %p57
      %s59 = ssub.s32 %s25, %s37
      %s60 = ssub.s32 %s26, %s33
      %s61 = sor.u32 %s59, %s60
      %p62 = scmp.eq.s32.totalorder %s61, 0
      %s64 = sadd.s32 %s63, 1
      %s65 = scalar_select %p62, %s63, %s64
      %p68 = pneg %p62
      %p69 = scmp.eq.s32.totalorder %s18, 1
      %p70 = por %p68, %p69
      %p71 = scmp.ne.s32.totalorder %s63, %s66
      %p72 = scmp.eq.s32.totalorder %s18, 0
      %p73 = por %p71, %p72
      %p74 = scmp.ne.s32.totalorder %s63, %s66
      %p75 = scmp.eq.s32.totalorder %s23, 1
      %p76 = por %p74, %p75
      %p77 = scmp.ne.s32.totalorder %s66, %s67
      %p78 = scmp.eq.s32.totalorder %s23, 0
      %p79 = por %p77, %p78
      %p80 = scmp.ne.s32.totalorder %s66, %s67
      %p81 = scmp.eq.s32.totalorder %s24, 1
      %p82 = por %p80, %p81
      %p84 = scmp.ne.s32.totalorder %s67, %s83
      %p85 = scmp.eq.s32.totalorder %s24, 0
      %p86 = por %p84, %p85
      %s87 = ssub.s32 %s26, %s33
      %p88 = scmp.eq.s32.totalorder %s87, 0
      %s90 = sadd.s32 %s89, 1
      %s91 = scalar_select %p88, %s89, %s90
      %p94 = pneg %p88
      %p95 = scmp.eq.s32.totalorder %s18, 1
      %p96 = por %p94, %p95
      %p97 = scmp.ne.s32.totalorder %s89, %s92
      %p98 = scmp.eq.s32.totalorder %s18, 0
      %p99 = por %p97, %p98
      %p100 = scmp.ne.s32.totalorder %s89, %s92
      %p101 = scmp.eq.s32.totalorder %s23, 1
      %p102 = por %p100, %p101
      %p103 = scmp.ne.s32.totalorder %s92, %s93
      %p104 = scmp.eq.s32.totalorder %s23, 0
      %p105 = por %p103, %p104
      %p106 = scmp.ne.s32.totalorder %s92, %s93
      %p107 = scmp.eq.s32.totalorder %s24, 1
      %p108 = por %p106, %p107
      %p110 = scmp.ne.s32.totalorder %s93, %s109
      %p111 = scmp.eq.s32.totalorder %s24, 0
      %p112 = por %p110, %p111
      %s114 = sadd.s32 %s113, 1
      %p117 = scmp.eq.s32.totalorder %s18, 1
      %p118 = scmp.ne.s32.totalorder %s113, %s115
      %p119 = scmp.eq.s32.totalorder %s18, 0
      %p120 = por %p118, %p119
      %p121 = scmp.ne.s32.totalorder %s113, %s115
      %p122 = scmp.eq.s32.totalorder %s23, 1
      %p123 = por %p121, %p122
      %p124 = scmp.ne.s32.totalorder %s115, %s116
      %p125 = scmp.eq.s32.totalorder %s23, 0
      %p126 = por %p124, %p125
      %p127 = scmp.ne.s32.totalorder %s115, %s116
      %p128 = scmp.eq.s32.totalorder %s24, 1
      %p129 = por %p127, %p128
      %p131 = scmp.ne.s32.totalorder %s116, %s130
      %p132 = scmp.eq.s32.totalorder %s24, 0
      %p133 = por %p131, %p132
      %s134 = ssub.s32 %s25, %s37
      %p135 = scmp.eq.s32.totalorder %s134, 0
      %s137 = sadd.s32 %s136, 1
      %s138 = scalar_select %p135, %s136, %s137
      %p141 = pneg %p135
      %p142 = scmp.eq.s32.totalorder %s18, 1
      %p143 = por %p141, %p142
      %p144 = scmp.ne.s32.totalorder %s136, %s139
      %p145 = scmp.eq.s32.totalorder %s18, 0
      %p146 = por %p144, %p145
      %p147 = scmp.ne.s32.totalorder %s136, %s139
      %p148 = scmp.eq.s32.totalorder %s23, 1
      %p149 = por %p147, %p148
      %p150 = scmp.ne.s32.totalorder %s139, %s140
      %p151 = scmp.eq.s32.totalorder %s23, 0
      %p152 = por %p150, %p151
      %p153 = scmp.ne.s32.totalorder %s139, %s140
      %p154 = scmp.eq.s32.totalorder %s24, 1
      %p155 = por %p153, %p154
      %p157 = scmp.ne.s32.totalorder %s140, %s156
      %p158 = scmp.eq.s32.totalorder %s24, 0
      %p159 = por %p157, %p158
      %p160 = scmp.le.s32.totalorder 1, %s18
      %p161 = scmp.lt.s32.totalorder %s18, 3
      %p162 = pnand %p160, %p161
      %p163 = pneg %p162
      // Predicated region
      $region9: #{tpu_custom_call.1} parent=5 // pred_check
        _
      $region10: #{tpu_custom_call.1} parent=5 // pred_check_branch
        %165 = sbr.rel (%p162) target = $region12
      $region11: #{tpu_custom_call.1} parent=5 // pred_region
        %s166 = ssub.s32 %s18, 1
        // Predicated region
        $region13: #{tpu_custom_call.1} parent=11 // pred_check
          %p167 = pneg %p51
        $region14: #{tpu_custom_call.1} parent=11 // pred_check_branch
          %169 = sbr.rel (%p167) target = $region16
        $region15: #{tpu_custom_call.1} parent=11 // pred_region
          _
        $region16: #{tpu_custom_call.1} parent=11 // pred_fallthru
          _
        // Predicated region
        $region17: #{tpu_custom_call.1} parent=11 // pred_check
          %p170 = pneg %p126
        $region18: #{tpu_custom_call.1} parent=11 // pred_check_branch
          %172 = sbr.rel (%p170) target = $region20
        $region19: #{tpu_custom_call.1} parent=11 // pred_region
          _
        $region20: #{tpu_custom_call.1} parent=11 // pred_fallthru
          _
      $region12: #{tpu_custom_call.1} parent=5 // pred_fallthru
        _
      %p173 = scmp.lt.s32.totalorder %s18, 2
      // Predicated region
      $region21: #{tpu_custom_call.1} parent=5 // pred_check
        %p174 = pneg %p173
      $region22: #{tpu_custom_call.1} parent=5 // pred_check_branch
        %176 = sbr.rel (%p174) target = $region24
      $region23: #{tpu_custom_call.1} parent=5 // pred_region
        // Predicated region
        $region25: #{tpu_custom_call.1} parent=23 // pred_check
          %p177 = pneg %p73
        $region26: #{tpu_custom_call.1} parent=23 // pred_check_branch
          %179 = sbr.rel (%p177) target = $region28
        $region27: #{tpu_custom_call.1} parent=23 // pred_region
          %s180 = sand.u32 %s63, 1
          %s181 = scalar_lea.sflag [#allocation5], %s180
          %s182 = sand.u32 %s63, 1
          %s183 = smul.addr %s182, 256
          %s184 = scalar_lea.vmem [#allocation4], %s183
          %s185 = smul.u32 16, %s25
          %s186 = smul.u32 4, %s26
          %s188 = ssub.s32 4096, 4096
          %189 = vsyncadd %s181, %s188
          %s190 = smul.addr %s185, 8
          %s191 = sadd.s32 %s186, %s190
          %s192 = smul.addr %s191, 64
          %s193 = scalar_lea.hbm %s1, %s192
          %s194 = sshll.u32 %s184, 4
          %s195 = int_to_ptr.vmem [resolvable:$true] %s194
          %200 = dma.hbm_to_vmem [thread:$0]  %s193, 4096, %s195, %s181, 512, 256, 16
        $region28: #{tpu_custom_call.1} parent=23 // pred_fallthru
          _
        // Predicated region
        $region29: #{tpu_custom_call.1} parent=23 // pred_check
          %p201 = pneg %p99
        $region30: #{tpu_custom_call.1} parent=23 // pred_check_branch
          %203 = sbr.rel (%p201) target = $region32
        $region31: #{tpu_custom_call.1} parent=23 // pred_region
          %s204 = sand.u32 %s89, 1
          %s205 = scalar_lea.sflag [#allocation8], %s204
          %s206 = sand.u32 %s89, 1
          %s207 = smul.addr %s206, 256
          %s208 = scalar_lea.vmem [#allocation7], %s207
          %s209 = smul.u32 64, %s26
          %s211 = ssub.s32 4096, 4096
          %212 = vsyncadd %s205, %s211
          %s213 = smul.addr %s209, 64
          %s214 = scalar_lea.hbm %s2, %s213
          %s215 = sshll.u32 %s208, 4
          %s216 = int_to_ptr.vmem [resolvable:$true] %s215
          %221 = dma.hbm_to_vmem [thread:$0]  %s214, 4096, %s216, %s205, 64, 64, 4
        $region32: #{tpu_custom_call.1} parent=23 // pred_fallthru
          _
      $region24: #{tpu_custom_call.1} parent=5 // pred_fallthru
        _
      %p222 = scmp.le.s32.totalorder 1, %s18
      %p223 = scmp.lt.s32.totalorder %s18, 3
      %p224 = pnand %p222, %p223
      %p225 = pneg %p224
      // Predicated region
      $region33: #{tpu_custom_call.1} parent=5 // pred_check
        _
      $region34: #{tpu_custom_call.1} parent=5 // pred_check_branch
        %227 = sbr.rel (%p224) target = $region36
      $region35: #{tpu_custom_call.1} parent=5 // pred_region
        %s228 = ssub.s32 %s18, 1
        %s229 = sand.u32 %s66, 1
        %s230 = scalar_lea.sflag [#allocation5], %s229
        %s231 = sand.u32 %s66, 1
        %s232 = smul.addr %s231, 256
        %s233 = scalar_lea.vmem [#allocation4], %s232
        // Predicated region
        $region37: #{tpu_custom_call.1} parent=35 // pred_check
          %p234 = pneg %p79
        $region38: #{tpu_custom_call.1} parent=35 // pred_check_branch
          %236 = sbr.rel (%p234) target = $region40
        $region39: #{tpu_custom_call.1} parent=35 // pred_region
          %237 = dma.done %s230, 4096
        $region40: #{tpu_custom_call.1} parent=35 // pred_fallthru
          _
        %s238 = sand.u32 %s92, 1
        %s239 = scalar_lea.sflag [#allocation8], %s238
        %s240 = sand.u32 %s92, 1
        %s241 = smul.addr %s240, 256
        %s242 = scalar_lea.vmem [#allocation7], %s241
        // Predicated region
        $region41: #{tpu_custom_call.1} parent=35 // pred_check
          %p243 = pneg %p105
        $region42: #{tpu_custom_call.1} parent=35 // pred_check_branch
          %245 = sbr.rel (%p243) target = $region44
        $region43: #{tpu_custom_call.1} parent=35 // pred_region
          %246 = dma.done %s239, 4096
        $region44: #{tpu_custom_call.1} parent=35 // pred_fallthru
          _
        %p247 = pneg %p51
        %p248 = pneg %p48
        %s249 = sand.u32 %s66, 1
        %s250 = scalar_lea.sflag [#allocation5], %s249
        %s251 = sand.u32 %s66, 1
        %s252 = smul.addr %s251, 256
        %s253 = scalar_lea.vmem [#allocation4], %s252
        %p254 = pneg %p79
        %p255 = pneg %p76
        %s256 = sand.u32 %s92, 1
        %s257 = scalar_lea.sflag [#allocation8], %s256
        %s258 = sand.u32 %s92, 1
        %s259 = smul.addr %s258, 256
        %s260 = scalar_lea.vmem [#allocation7], %s259
        %p261 = pneg %p105
        %p262 = pneg %p102
        %p263 = pneg %p126
        %p264 = pneg %p123
        %p265 = pneg %p152
        %p266 = pneg %p149
        %s267 = smul.u32 16, %s27
        %s268 = smul.u32 4, %s28
        %s269 = smul.u32 64, %s28
        %s270 = smul.u32 16, %s27
        %p272 = scmp.eq.s32.totalorder %s28, 0
        // Predicated region
        $region45: #{tpu_custom_call.1} parent=35 // pred_check
          %p273 = pneg %p272
        $region46: #{tpu_custom_call.1} parent=35 // pred_check_branch
          %275 = sbr.rel (%p273) target = $region48
        $region47: #{tpu_custom_call.1} parent=35 // pred_region
          %276 = vst [vmem:[#allocation2] sm:$0xff] 0.0
          %277 = vst [vmem:[#allocation2 + $0x8] sm:$0xff] 0.0
          %278 = vst [vmem:[#allocation2 + $0x10] sm:$0xff] 0.0
          %279 = vst [vmem:[#allocation2 + $0x18] sm:$0xff] 0.0
          %280 = vst [vmem:[#allocation2 + $0x20] sm:$0xff] 0.0
          %281 = vst [vmem:[#allocation2 + $0x28] sm:$0xff] 0.0
          %282 = vst [vmem:[#allocation2 + $0x30] sm:$0xff] 0.0
          %283 = vst [vmem:[#allocation2 + $0x38] sm:$0xff] 0.0
          %284 = vst [vmem:[#allocation2 + $0x40] sm:$0xff] 0.0
          %285 = vst [vmem:[#allocation2 + $0x48] sm:$0xff] 0.0
          %286 = vst [vmem:[#allocation2 + $0x50] sm:$0xff] 0.0
          %287 = vst [vmem:[#allocation2 + $0x58] sm:$0xff] 0.0
          %288 = vst [vmem:[#allocation2 + $0x60] sm:$0xff] 0.0
          %289 = vst [vmem:[#allocation2 + $0x68] sm:$0xff] 0.0
          %290 = vst [vmem:[#allocation2 + $0x70] sm:$0xff] 0.0
          %291 = vst [vmem:[#allocation2 + $0x78] sm:$0xff] 0.0
        $region48: #{tpu_custom_call.1} parent=35 // pred_fallthru
          _
        %v292 = vld [vmem:[#allocation2] sm:$0xff]
        %v293 = vld [vmem:[#allocation2 + $0x8] sm:$0xff]
        %v294 = vld [vmem:[#allocation2 + $0x10] sm:$0xff]
        %v295 = vld [vmem:[#allocation2 + $0x18] sm:$0xff]
        %v296 = vld [vmem:[#allocation2 + $0x20] sm:$0xff]
        %v297 = vld [vmem:[#allocation2 + $0x28] sm:$0xff]
        %v298 = vld [vmem:[#allocation2 + $0x30] sm:$0xff]
        %v299 = vld [vmem:[#allocation2 + $0x38] sm:$0xff]
        %v300 = vld [vmem:[#allocation2 + $0x40] sm:$0xff]
        %v301 = vld [vmem:[#allocation2 + $0x48] sm:$0xff]
        %v302 = vld [vmem:[#allocation2 + $0x50] sm:$0xff]
        %v303 = vld [vmem:[#allocation2 + $0x58] sm:$0xff]
        %v304 = vld [vmem:[#allocation2 + $0x60] sm:$0xff]
        %v305 = vld [vmem:[#allocation2 + $0x68] sm:$0xff]
        %v306 = vld [vmem:[#allocation2 + $0x70] sm:$0xff]
        %v307 = vld [vmem:[#allocation2 + $0x78] sm:$0xff]
        %v308 = vld [vmem:[%s233] sm:$0xff]
        %v309 = vld [vmem:[%s233 + $0x8] sm:$0xff]
        %v310 = vld [vmem:[%s233 + $0x10] sm:$0xff]
        %v311 = vld [vmem:[%s233 + $0x18] sm:$0xff]
        %v312 = vld [vmem:[%s233 + $0x20] sm:$0xff]
        %v313 = vld [vmem:[%s233 + $0x28] sm:$0xff]
        %v314 = vld [vmem:[%s233 + $0x30] sm:$0xff]
        %v315 = vld [vmem:[%s233 + $0x38] sm:$0xff]
        %v316 = vld [vmem:[%s233 + $0x40] sm:$0xff]
        %v317 = vld [vmem:[%s233 + $0x48] sm:$0xff]
        %v318 = vld [vmem:[%s233 + $0x50] sm:$0xff]
        %v319 = vld [vmem:[%s233 + $0x58] sm:$0xff]
        %v320 = vld [vmem:[%s233 + $0x60] sm:$0xff]
        %v321 = vld [vmem:[%s233 + $0x68] sm:$0xff]
        %v322 = vld [vmem:[%s233 + $0x70] sm:$0xff]
        %v323 = vld [vmem:[%s233 + $0x78] sm:$0xff]
        %v324 = vld [vmem:[%s233 + $0x80] sm:$0xff]
        %v325 = vld [vmem:[%s233 + $0x88] sm:$0xff]
        %v326 = vld [vmem:[%s233 + $0x90] sm:$0xff]
        %v327 = vld [vmem:[%s233 + $0x98] sm:$0xff]
        %v328 = vld [vmem:[%s233 + $0xa0] sm:$0xff]
        %v329 = vld [vmem:[%s233 + $0xa8] sm:$0xff]
        %v330 = vld [vmem:[%s233 + $0xb0] sm:$0xff]
        %v331 = vld [vmem:[%s233 + $0xb8] sm:$0xff]
        %v332 = vld [vmem:[%s233 + $0xc0] sm:$0xff]
        %v333 = vld [vmem:[%s233 + $0xc8] sm:$0xff]
        %v334 = vld [vmem:[%s233 + $0xd0] sm:$0xff]
        %v335 = vld [vmem:[%s233 + $0xd8] sm:$0xff]
        %v336 = vld [vmem:[%s233 + $0xe0] sm:$0xff]
        %v337 = vld [vmem:[%s233 + $0xe8] sm:$0xff]
        %v338 = vld [vmem:[%s233 + $0xf0] sm:$0xff]
        %v339 = vld [vmem:[%s233 + $0xf8] sm:$0xff]
        %v340 = vld [vmem:[%s242] sm:$0xf]
        %v341 = vld [vmem:[%s242 + $0x4] sm:$0xf]
        %v342 = vld [vmem:[%s242 + $0x8] sm:$0xf]
        %v343 = vld [vmem:[%s242 + $0xc] sm:$0xf]
        %v344 = vld [vmem:[%s242 + $0x10] sm:$0xf]
        %v345 = vld [vmem:[%s242 + $0x14] sm:$0xf]
        %v346 = vld [vmem:[%s242 + $0x18] sm:$0xf]
        %v347 = vld [vmem:[%s242 + $0x1c] sm:$0xf]
        %v348 = vld [vmem:[%s242 + $0x20] sm:$0xf]
        %v349 = vld [vmem:[%s242 + $0x24] sm:$0xf]
        %v350 = vld [vmem:[%s242 + $0x28] sm:$0xf]
        %v351 = vld [vmem:[%s242 + $0x2c] sm:$0xf]
        %v352 = vld [vmem:[%s242 + $0x30] sm:$0xf]
        %v353 = vld [vmem:[%s242 + $0x34] sm:$0xf]
        %v354 = vld [vmem:[%s242 + $0x38] sm:$0xf]
        %v355 = vld [vmem:[%s242 + $0x3c] sm:$0xf]
        %v356 = vld [vmem:[%s242 + $0x40] sm:$0xf]
        %v357 = vld [vmem:[%s242 + $0x44] sm:$0xf]
        %v358 = vld [vmem:[%s242 + $0x48] sm:$0xf]
        %v359 = vld [vmem:[%s242 + $0x4c] sm:$0xf]
        %v360 = vld [vmem:[%s242 + $0x50] sm:$0xf]
        %v361 = vld [vmem:[%s242 + $0x54] sm:$0xf]
        %v362 = vld [vmem:[%s242 + $0x58] sm:$0xf]
        %v363 = vld [vmem:[%s242 + $0x5c] sm:$0xf]
        %v364 = vld [vmem:[%s242 + $0x60] sm:$0xf]
        %v365 = vld [vmem:[%s242 + $0x64] sm:$0xf]
        %v366 = vld [vmem:[%s242 + $0x68] sm:$0xf]
        %v367 = vld [vmem:[%s242 + $0x6c] sm:$0xf]
        %v368 = vld [vmem:[%s242 + $0x70] sm:$0xf]
        %v369 = vld [vmem:[%s242 + $0x74] sm:$0xf]
        %v370 = vld [vmem:[%s242 + $0x78] sm:$0xf]
        %v371 = vld [vmem:[%s242 + $0x7c] sm:$0xf]
        %v372 = vld [vmem:[%s242 + $0x80] sm:$0xf]
        %v373 = vld [vmem:[%s242 + $0x84] sm:$0xf]
        %v374 = vld [vmem:[%s242 + $0x88] sm:$0xf]
        %v375 = vld [vmem:[%s242 + $0x8c] sm:$0xf]
        %v376 = vld [vmem:[%s242 + $0x90] sm:$0xf]
        %v377 = vld [vmem:[%s242 + $0x94] sm:$0xf]
        %v378 = vld [vmem:[%s242 + $0x98] sm:$0xf]
        %v379 = vld [vmem:[%s242 + $0x9c] sm:$0xf]
        %v380 = vld [vmem:[%s242 + $0xa0] sm:$0xf]
        %v381 = vld [vmem:[%s242 + $0xa4] sm:$0xf]
        %v382 = vld [vmem:[%s242 + $0xa8] sm:$0xf]
        %v383 = vld [vmem:[%s242 + $0xac] sm:$0xf]
        %v384 = vld [vmem:[%s242 + $0xb0] sm:$0xf]
        %v385 = vld [vmem:[%s242 + $0xb4] sm:$0xf]
        %v386 = vld [vmem:[%s242 + $0xb8] sm:$0xf]
        %v387 = vld [vmem:[%s242 + $0xbc] sm:$0xf]
        %v388 = vld [vmem:[%s242 + $0xc0] sm:$0xf]
        %v389 = vld [vmem:[%s242 + $0xc4] sm:$0xf]
        %v390 = vld [vmem:[%s242 + $0xc8] sm:$0xf]
        %v391 = vld [vmem:[%s242 + $0xcc] sm:$0xf]
        %v392 = vld [vmem:[%s242 + $0xd0] sm:$0xf]
        %v393 = vld [vmem:[%s242 + $0xd4] sm:$0xf]
        %v394 = vld [vmem:[%s242 + $0xd8] sm:$0xf]
        %v395 = vld [vmem:[%s242 + $0xdc] sm:$0xf]
        %v396 = vld [vmem:[%s242 + $0xe0] sm:$0xf]
        %v397 = vld [vmem:[%s242 + $0xe4] sm:$0xf]
        %v398 = vld [vmem:[%s242 + $0xe8] sm:$0xf]
        %v399 = vld [vmem:[%s242 + $0xec] sm:$0xf]
        %v400 = vld [vmem:[%s242 + $0xf0] sm:$0xf]
        %v401 = vld [vmem:[%s242 + $0xf4] sm:$0xf]
        %v402 = vld [vmem:[%s242 + $0xf8] sm:$0xf]
        %v403 = vld [vmem:[%s242 + $0xfc] sm:$0xf]
        %v436 = vunpack.c.l.b16 %v308
        %v437 = vunpack.c.h.b16 %v308
        %v438 = vunpack.c.l.b16 %v309
        %v439 = vunpack.c.h.b16 %v309
        %v440 = vunpack.c.l.b16 %v310
        %v441 = vunpack.c.h.b16 %v310
        %v442 = vunpack.c.l.b16 %v311
        %v443 = vunpack.c.h.b16 %v311
        %v444 = vunpack.c.l.b16 %v312
        %v445 = vunpack.c.h.b16 %v312
        %v446 = vunpack.c.l.b16 %v313
        %v447 = vunpack.c.h.b16 %v313
        %v448 = vunpack.c.l.b16 %v314
        %v449 = vunpack.c.h.b16 %v314
        %v450 = vunpack.c.l.b16 %v315
        %v451 = vunpack.c.h.b16 %v315
        %v452 = vunpack.c.l.b16 %v316
        %v453 = vunpack.c.h.b16 %v316
        %v454 = vunpack.c.l.b16 %v317
        %v455 = vunpack.c.h.b16 %v317
        %v456 = vunpack.c.l.b16 %v318
        %v457 = vunpack.c.h.b16 %v318
        %v458 = vunpack.c.l.b16 %v319
        %v459 = vunpack.c.h.b16 %v319
        %v460 = vunpack.c.l.b16 %v320
        %v461 = vunpack.c.h.b16 %v320
        %v462 = vunpack.c.l.b16 %v321
        %v463 = vunpack.c.h.b16 %v321
        %v464 = vunpack.c.l.b16 %v322
        %v465 = vunpack.c.h.b16 %v322
        %v466 = vunpack.c.l.b16 %v323
        %v467 = vunpack.c.h.b16 %v323
        %v468 = vunpack.c.l.b16 %v324
        %v469 = vunpack.c.h.b16 %v324
        %v470 = vunpack.c.l.b16 %v325
        %v471 = vunpack.c.h.b16 %v325
        %v472 = vunpack.c.l.b16 %v326
        %v473 = vunpack.c.h.b16 %v326
        %v474 = vunpack.c.l.b16 %v327
        %v475 = vunpack.c.h.b16 %v327
        %v476 = vunpack.c.l.b16 %v328
        %v477 = vunpack.c.h.b16 %v328
        %v478 = vunpack.c.l.b16 %v329
        %v479 = vunpack.c.h.b16 %v329
        %v480 = vunpack.c.l.b16 %v330
        %v481 = vunpack.c.h.b16 %v330
        %v482 = vunpack.c.l.b16 %v331
        %v483 = vunpack.c.h.b16 %v331
        %v484 = vunpack.c.l.b16 %v332
        %v485 = vunpack.c.h.b16 %v332
        %v486 = vunpack.c.l.b16 %v333
        %v487 = vunpack.c.h.b16 %v333
        %v488 = vunpack.c.l.b16 %v334
        %v489 = vunpack.c.h.b16 %v334
        %v490 = vunpack.c.l.b16 %v335
        %v491 = vunpack.c.h.b16 %v335
        %v492 = vunpack.c.l.b16 %v336
        %v493 = vunpack.c.h.b16 %v336
        %v494 = vunpack.c.l.b16 %v337
        %v495 = vunpack.c.h.b16 %v337
        %v496 = vunpack.c.l.b16 %v338
        %v497 = vunpack.c.h.b16 %v338
        %v498 = vunpack.c.l.b16 %v339
        %v499 = vunpack.c.h.b16 %v339
        %v500 = vpack.c.b16 %v440, %v436
        %v501 = vpack.c.b16 %v441, %v437
        %v502 = vpack.c.b16 %v442, %v438
        %v503 = vpack.c.b16 %v443, %v439
        %v504 = vpack.c.b16 %v448, %v444
        %v505 = vpack.c.b16 %v449, %v445
        %v506 = vpack.c.b16 %v450, %v446
        %v507 = vpack.c.b16 %v451, %v447
        %v508 = vpack.c.b16 %v456, %v452
        %v509 = vpack.c.b16 %v457, %v453
        %v510 = vpack.c.b16 %v458, %v454
        %v511 = vpack.c.b16 %v459, %v455
        %v512 = vpack.c.b16 %v464, %v460
        %v513 = vpack.c.b16 %v465, %v461
        %v514 = vpack.c.b16 %v466, %v462
        %v515 = vpack.c.b16 %v467, %v463
        %v516 = vpack.c.b16 %v472, %v468
        %v517 = vpack.c.b16 %v473, %v469
        %v518 = vpack.c.b16 %v474, %v470
        %v519 = vpack.c.b16 %v475, %v471
        %v520 = vpack.c.b16 %v480, %v476
        %v521 = vpack.c.b16 %v481, %v477
        %v522 = vpack.c.b16 %v482, %v478
        %v523 = vpack.c.b16 %v483, %v479
        %v524 = vpack.c.b16 %v488, %v484
        %v525 = vpack.c.b16 %v489, %v485
        %v526 = vpack.c.b16 %v490, %v486
        %v527 = vpack.c.b16 %v491, %v487
        %v528 = vpack.c.b16 %v496, %v492
        %v529 = vpack.c.b16 %v497, %v493
        %v530 = vpack.c.b16 %v498, %v494
        %v531 = vpack.c.b16 %v499, %v495
        %v628 = vunpack.c.l.b16 %v340
        %v629 = vunpack.c.l.b16 %v341
        %v630 = vunpack.c.l.b16 %v342
        %v631 = vunpack.c.l.b16 %v343
        %v632 = vunpack.c.l.b16 %v344
        %v633 = vunpack.c.l.b16 %v345
        %v634 = vunpack.c.l.b16 %v346
        %v635 = vunpack.c.l.b16 %v347
        %v636 = vunpack.c.l.b16 %v348
        %v637 = vunpack.c.l.b16 %v349
        %v638 = vunpack.c.l.b16 %v350
        %v639 = vunpack.c.l.b16 %v351
        %v640 = vunpack.c.l.b16 %v352
        %v641 = vunpack.c.l.b16 %v353
        %v642 = vunpack.c.l.b16 %v354
        %v643 = vunpack.c.l.b16 %v355
        %v644 = vunpack.c.l.b16 %v356
        %v645 = vunpack.c.l.b16 %v357
        %v646 = vunpack.c.l.b16 %v358
        %v647 = vunpack.c.l.b16 %v359
        %v648 = vunpack.c.l.b16 %v360
        %v649 = vunpack.c.l.b16 %v361
        %v650 = vunpack.c.l.b16 %v362
        %v651 = vunpack.c.l.b16 %v363
        %v652 = vunpack.c.l.b16 %v364
        %v653 = vunpack.c.l.b16 %v365
        %v654 = vunpack.c.l.b16 %v366
        %v655 = vunpack.c.l.b16 %v367
        %v656 = vunpack.c.l.b16 %v368
        %v657 = vunpack.c.l.b16 %v369
        %v658 = vunpack.c.l.b16 %v370
        %v659 = vunpack.c.l.b16 %v371
        %v660 = vunpack.c.l.b16 %v372
        %v661 = vunpack.c.l.b16 %v373
        %v662 = vunpack.c.l.b16 %v374
        %v663 = vunpack.c.l.b16 %v375
        %v664 = vunpack.c.l.b16 %v376
        %v665 = vunpack.c.l.b16 %v377
        %v666 = vunpack.c.l.b16 %v378
        %v667 = vunpack.c.l.b16 %v379
        %v668 = vunpack.c.l.b16 %v380
        %v669 = vunpack.c.l.b16 %v381
        %v670 = vunpack.c.l.b16 %v382
        %v671 = vunpack.c.l.b16 %v383
        %v672 = vunpack.c.l.b16 %v384
        %v673 = vunpack.c.l.b16 %v385
        %v674 = vunpack.c.l.b16 %v386
        %v675 = vunpack.c.l.b16 %v387
        %v676 = vunpack.c.l.b16 %v388
        %v677 = vunpack.c.l.b16 %v389
        %v678 = vunpack.c.l.b16 %v390
        %v679 = vunpack.c.l.b16 %v391
        %v680 = vunpack.c.l.b16 %v392
        %v681 = vunpack.c.l.b16 %v393
        %v682 = vunpack.c.l.b16 %v394
        %v683 = vunpack.c.l.b16 %v395
        %v684 = vunpack.c.l.b16 %v396
        %v685 = vunpack.c.l.b16 %v397
        %v686 = vunpack.c.l.b16 %v398
        %v687 = vunpack.c.l.b16 %v399
        %v688 = vunpack.c.l.b16 %v400
        %v689 = vunpack.c.l.b16 %v401
        %v690 = vunpack.c.l.b16 %v402
        %v691 = vunpack.c.l.b16 %v403
        %v692 = vpack.c.b16 %v629, %v628
        %v693 = vpack.c.b16 %v631, %v630
        %v694 = vpack.c.b16 %v633, %v632
        %v695 = vpack.c.b16 %v635, %v634
        %v696 = vpack.c.b16 %v637, %v636
        %v697 = vpack.c.b16 %v639, %v638
        %v698 = vpack.c.b16 %v641, %v640
        %v699 = vpack.c.b16 %v643, %v642
        %v700 = vpack.c.b16 %v645, %v644
        %v701 = vpack.c.b16 %v647, %v646
        %v702 = vpack.c.b16 %v649, %v648
        %v703 = vpack.c.b16 %v651, %v650
        %v704 = vpack.c.b16 %v653, %v652
        %v705 = vpack.c.b16 %v655, %v654
        %v706 = vpack.c.b16 %v657, %v656
        %v707 = vpack.c.b16 %v659, %v658
        %v708 = vpack.c.b16 %v661, %v660
        %v709 = vpack.c.b16 %v663, %v662
        %v710 = vpack.c.b16 %v665, %v664
        %v711 = vpack.c.b16 %v667, %v666
        %v712 = vpack.c.b16 %v669, %v668
        %v713 = vpack.c.b16 %v671, %v670
        %v714 = vpack.c.b16 %v673, %v672
        %v715 = vpack.c.b16 %v675, %v674
        %v716 = vpack.c.b16 %v677, %v676
        %v717 = vpack.c.b16 %v679, %v678
        %v718 = vpack.c.b16 %v681, %v680
        %v719 = vpack.c.b16 %v683, %v682
        %v720 = vpack.c.b16 %v685, %v684
        %v721 = vpack.c.b16 %v687, %v686
        %v722 = vpack.c.b16 %v689, %v688
        %v723 = vpack.c.b16 %v691, %v690
        %756 = vmatprep.subr.bf16.mxu0 0
        %757 = vmatpush1.bf16.msra.mxu0 %v699
        %758 = vmatprep.subr.bf16.mxu0 0
        %759 = vmatpush1.bf16.msra.mxu0 %v698
        %760 = vmatprep.subr.bf16.mxu0 0
        %761 = vmatpush1.bf16.msra.mxu0 %v697
        %762 = vmatprep.subr.bf16.mxu0 0
        %763 = vmatpush1.bf16.msra.mxu0 %v696
        %764 = vmatprep.subr.bf16.mxu0 0
        %765 = vmatpush1.bf16.msra.mxu0 %v695
        %766 = vmatprep.subr.bf16.mxu0 0
        %767 = vmatpush1.bf16.msra.mxu0 %v694
        %768 = vmatprep.subr.bf16.mxu0 0
        %769 = vmatpush1.bf16.msra.mxu0 %v693
        %770 = vmatprep.subr.bf16.mxu0 0
        %771 = vmatpush1.bf16.msra.mxu0 %v692
        %772 = vmatprep.subr.bf16.mxu0 0
        %773 = vmatpush2.bf16.msra.mxu0 %v707
        %774 = vmatprep.subr.bf16.mxu0 0
        %775 = vmatpush2.bf16.msra.mxu0 %v706
        %776 = vmatprep.subr.bf16.mxu0 0
        %777 = vmatpush2.bf16.msra.mxu0 %v705
        %778 = vmatprep.subr.bf16.mxu0 0
        %779 = vmatpush2.bf16.msra.mxu0 %v704
        %780 = vmatprep.subr.bf16.mxu0 0
        %781 = vmatpush2.bf16.msra.mxu0 %v703
        %782 = vmatprep.subr.bf16.mxu0 0
        %783 = vmatpush2.bf16.msra.mxu0 %v702
        %784 = vmatprep.subr.bf16.mxu0 0
        %785 = vmatpush2.bf16.msra.mxu0 %v701
        %786 = vmatprep.subr.bf16.mxu0 0
        %787 = vmatpush2.bf16.msra.mxu0 %v700
        %788 = vmatprep.mubr.bf16.mxu0 %v501
        %789 = vmatmul.mubr.bf16.gmra.mxu0 %v500
        %v790 = vpop.f32.mrf.mxu0
        %v791 = vadd.f32 0.0, %v790
        %v792 = vpop.f32.mrf.mxu0
        %v793 = vpop.f32.mrf.mxu0
        %v794 = vadd.f32 0.0, %v793
        %v795 = vpop.f32.mrf.mxu0
        %796 = vmatprep.mubr.bf16.mxu0 %v505
        %797 = vmatmul.mubr.bf16.gmra.mxu0 %v504
        %v798 = vpop.f32.mrf.mxu0
        %v799 = vadd.f32 0.0, %v798
        %v800 = vpop.f32.mrf.mxu0
        %v801 = vpop.f32.mrf.mxu0
        %v802 = vadd.f32 0.0, %v801
        %v803 = vpop.f32.mrf.mxu0
        %804 = vmatprep.mubr.bf16.mxu0 %v509
        %805 = vmatmul.mubr.bf16.gmra.mxu0 %v508
        %v806 = vpop.f32.mrf.mxu0
        %v807 = vadd.f32 0.0, %v806
        %v808 = vpop.f32.mrf.mxu0
        %v809 = vpop.f32.mrf.mxu0
        %v810 = vadd.f32 0.0, %v809
        %v811 = vpop.f32.mrf.mxu0
        %812 = vmatprep.mubr.bf16.mxu0 %v513
        %813 = vmatmul.mubr.bf16.gmra.mxu0 %v512
        %v814 = vpop.f32.mrf.mxu0
        %v815 = vadd.f32 0.0, %v814
        %v816 = vpop.f32.mrf.mxu0
        %v817 = vpop.f32.mrf.mxu0
        %v818 = vadd.f32 0.0, %v817
        %v819 = vpop.f32.mrf.mxu0
        %820 = vmatprep.mubr.bf16.mxu0 %v517
        %821 = vmatmul.mubr.bf16.gmra.mxu0 %v516
        %v822 = vpop.f32.mrf.mxu0
        %v823 = vadd.f32 0.0, %v822
        %v824 = vpop.f32.mrf.mxu0
        %v825 = vpop.f32.mrf.mxu0
        %v826 = vadd.f32 0.0, %v825
        %v827 = vpop.f32.mrf.mxu0
        %828 = vmatprep.mubr.bf16.mxu0 %v521
        %829 = vmatmul.mubr.bf16.gmra.mxu0 %v520
        %v830 = vpop.f32.mrf.mxu0
        %v831 = vadd.f32 0.0, %v830
        %v832 = vpop.f32.mrf.mxu0
        %v833 = vpop.f32.mrf.mxu0
        %v834 = vadd.f32 0.0, %v833
        %v835 = vpop.f32.mrf.mxu0
        %836 = vmatprep.mubr.bf16.mxu0 %v525
        %837 = vmatmul.mubr.bf16.gmra.mxu0 %v524
        %v838 = vpop.f32.mrf.mxu0
        %v839 = vadd.f32 0.0, %v838
        %v840 = vpop.f32.mrf.mxu0
        %v841 = vpop.f32.mrf.mxu0
        %v842 = vadd.f32 0.0, %v841
        %v843 = vpop.f32.mrf.mxu0
        %844 = vmatprep.mubr.bf16.mxu0 %v529
        %845 = vmatmul.mubr.bf16.gmra.mxu0 %v528
        %v846 = vpop.f32.mrf.mxu0
        %v847 = vadd.f32 0.0, %v846
        %v848 = vpop.f32.mrf.mxu0
        %v849 = vpop.f32.mrf.mxu0
        %v850 = vadd.f32 0.0, %v849
        %v851 = vpop.f32.mrf.mxu0
        %852 = vdwg.mxu0
        %853 = vmatprep.subr.bf16.mxu0 0
        %854 = vmatpush1.bf16.msra.mxu0 %v715
        %855 = vmatprep.subr.bf16.mxu0 0
        %856 = vmatpush1.bf16.msra.mxu0 %v714
        %857 = vmatprep.subr.bf16.mxu0 0
        %858 = vmatpush1.bf16.msra.mxu0 %v713
        %859 = vmatprep.subr.bf16.mxu0 0
        %860 = vmatpush1.bf16.msra.mxu0 %v712
        %861 = vmatprep.subr.bf16.mxu0 0
        %862 = vmatpush1.bf16.msra.mxu0 %v711
        %863 = vmatprep.subr.bf16.mxu0 0
        %864 = vmatpush1.bf16.msra.mxu0 %v710
        %865 = vmatprep.subr.bf16.mxu0 0
        %866 = vmatpush1.bf16.msra.mxu0 %v709
        %867 = vmatprep.subr.bf16.mxu0 0
        %868 = vmatpush1.bf16.msra.mxu0 %v708
        %869 = vmatprep.subr.bf16.mxu0 0
        %870 = vmatpush2.bf16.msra.mxu0 %v723
        %871 = vmatprep.subr.bf16.mxu0 0
        %872 = vmatpush2.bf16.msra.mxu0 %v722
        %873 = vmatprep.subr.bf16.mxu0 0
        %874 = vmatpush2.bf16.msra.mxu0 %v721
        %875 = vmatprep.subr.bf16.mxu0 0
        %876 = vmatpush2.bf16.msra.mxu0 %v720
        %877 = vmatprep.subr.bf16.mxu0 0
        %878 = vmatpush2.bf16.msra.mxu0 %v719
        %879 = vmatprep.subr.bf16.mxu0 0
        %880 = vmatpush2.bf16.msra.mxu0 %v718
        %881 = vmatprep.subr.bf16.mxu0 0
        %882 = vmatpush2.bf16.msra.mxu0 %v717
        %883 = vmatprep.subr.bf16.mxu0 0
        %884 = vmatpush2.bf16.msra.mxu0 %v716
        %885 = vmatprep.mubr.bf16.mxu0 %v503
        %886 = vmatmul.mubr.bf16.gmra.mxu0 %v502
        %v887 = vpop.f32.mrf.mxu0
        %v888 = vadd.f32 %v791, %v887
        %v889 = vpop.f32.mrf.mxu0
        %v890 = vpop.f32.mrf.mxu0
        %v891 = vadd.f32 %v794, %v890
        %v892 = vpop.f32.mrf.mxu0
        %893 = vmatprep.mubr.bf16.mxu0 %v507
        %894 = vmatmul.mubr.bf16.gmra.mxu0 %v506
        %v895 = vpop.f32.mrf.mxu0
        %v896 = vadd.f32 %v799, %v895
        %v897 = vpop.f32.mrf.mxu0
        %v898 = vpop.f32.mrf.mxu0
        %v899 = vadd.f32 %v802, %v898
        %v900 = vpop.f32.mrf.mxu0
        %901 = vmatprep.mubr.bf16.mxu0 %v511
        %902 = vmatmul.mubr.bf16.gmra.mxu0 %v510
        %v903 = vpop.f32.mrf.mxu0
        %v904 = vadd.f32 %v807, %v903
        %v905 = vpop.f32.mrf.mxu0
        %v906 = vpop.f32.mrf.mxu0
        %v907 = vadd.f32 %v810, %v906
        %v908 = vpop.f32.mrf.mxu0
        %909 = vmatprep.mubr.bf16.mxu0 %v515
        %910 = vmatmul.mubr.bf16.gmra.mxu0 %v514
        %v911 = vpop.f32.mrf.mxu0
        %v912 = vadd.f32 %v815, %v911
        %v913 = vpop.f32.mrf.mxu0
        %v914 = vpop.f32.mrf.mxu0
        %v915 = vadd.f32 %v818, %v914
        %v916 = vpop.f32.mrf.mxu0
        %917 = vmatprep.mubr.bf16.mxu0 %v519
        %918 = vmatmul.mubr.bf16.gmra.mxu0 %v518
        %v919 = vpop.f32.mrf.mxu0
        %v920 = vadd.f32 %v823, %v919
        %v921 = vpop.f32.mrf.mxu0
        %v922 = vpop.f32.mrf.mxu0
        %v923 = vadd.f32 %v826, %v922
        %v924 = vpop.f32.mrf.mxu0
        %925 = vmatprep.mubr.bf16.mxu0 %v523
        %926 = vmatmul.mubr.bf16.gmra.mxu0 %v522
        %v927 = vpop.f32.mrf.mxu0
        %v928 = vadd.f32 %v831, %v927
        %v929 = vpop.f32.mrf.mxu0
        %v930 = vpop.f32.mrf.mxu0
        %v931 = vadd.f32 %v834, %v930
        %v932 = vpop.f32.mrf.mxu0
        %933 = vmatprep.mubr.bf16.mxu0 %v527
        %934 = vmatmul.mubr.bf16.gmra.mxu0 %v526
        %v935 = vpop.f32.mrf.mxu0
        %v936 = vadd.f32 %v839, %v935
        %v937 = vpop.f32.mrf.mxu0
        %v938 = vpop.f32.mrf.mxu0
        %v939 = vadd.f32 %v842, %v938
        %v940 = vpop.f32.mrf.mxu0
        %941 = vmatprep.mubr.bf16.mxu0 %v531
        %942 = vmatmul.mubr.bf16.gmra.mxu0 %v530
        %v943 = vpop.f32.mrf.mxu0
        %v944 = vadd.f32 %v847, %v943
        %v945 = vpop.f32.mrf.mxu0
        %v946 = vpop.f32.mrf.mxu0
        %v947 = vadd.f32 %v850, %v946
        %v948 = vpop.f32.mrf.mxu0
        %949 = vdwg.mxu0
        %v950 = vadd.f32 %v292, %v888
        %v951 = vadd.f32 %v293, %v891
        %v952 = vadd.f32 %v294, %v896
        %v953 = vadd.f32 %v295, %v899
        %v954 = vadd.f32 %v296, %v904
        %v955 = vadd.f32 %v297, %v907
        %v956 = vadd.f32 %v298, %v912
        %v957 = vadd.f32 %v299, %v915
        %v958 = vadd.f32 %v300, %v920
        %v959 = vadd.f32 %v301, %v923
        %v960 = vadd.f32 %v302, %v928
        %v961 = vadd.f32 %v303, %v931
        %v962 = vadd.f32 %v304, %v936
        %v963 = vadd.f32 %v305, %v939
        %v964 = vadd.f32 %v306, %v944
        %v965 = vadd.f32 %v307, %v947
        %966 = vst [vmem:[#allocation2] sm:$0xff] %v950
        %967 = vst [vmem:[#allocation2 + $0x8] sm:$0xff] %v951
        %968 = vst [vmem:[#allocation2 + $0x10] sm:$0xff] %v952
        %969 = vst [vmem:[#allocation2 + $0x18] sm:$0xff] %v953
        %970 = vst [vmem:[#allocation2 + $0x20] sm:$0xff] %v954
        %971 = vst [vmem:[#allocation2 + $0x28] sm:$0xff] %v955
        %972 = vst [vmem:[#allocation2 + $0x30] sm:$0xff] %v956
        %973 = vst [vmem:[#allocation2 + $0x38] sm:$0xff] %v957
        %974 = vst [vmem:[#allocation2 + $0x40] sm:$0xff] %v958
        %975 = vst [vmem:[#allocation2 + $0x48] sm:$0xff] %v959
        %976 = vst [vmem:[#allocation2 + $0x50] sm:$0xff] %v960
        %977 = vst [vmem:[#allocation2 + $0x58] sm:$0xff] %v961
        %978 = vst [vmem:[#allocation2 + $0x60] sm:$0xff] %v962
        %979 = vst [vmem:[#allocation2 + $0x68] sm:$0xff] %v963
        %980 = vst [vmem:[#allocation2 + $0x70] sm:$0xff] %v964
        %981 = vst [vmem:[#allocation2 + $0x78] sm:$0xff] %v965
        %p982 = scmp.eq.s32.totalorder %s28, 1
        // Predicated region
        $region49: #{tpu_custom_call.1} parent=35 // pred_check
          %p983 = pneg %p982
        $region50: #{tpu_custom_call.1} parent=35 // pred_check_branch
          %985 = sbr.rel (%p983) target = $region52
        $region51: #{tpu_custom_call.1} parent=35 // pred_region
          %s986 = sld [smem:[#allocation3]]
          %v987 = vstv %s986
          %v988 = vrcp.pop %v987
          %s989 = vtos %v988
          %v990 = vld [vmem:[#allocation2] sm:$0xff]
          %v991 = vld [vmem:[#allocation2 + $0x8] sm:$0xff]
          %v992 = vld [vmem:[#allocation2 + $0x10] sm:$0xff]
          %v993 = vld [vmem:[#allocation2 + $0x18] sm:$0xff]
          %v994 = vld [vmem:[#allocation2 + $0x20] sm:$0xff]
          %v995 = vld [vmem:[#allocation2 + $0x28] sm:$0xff]
          %v996 = vld [vmem:[#allocation2 + $0x30] sm:$0xff]
          %v997 = vld [vmem:[#allocation2 + $0x38] sm:$0xff]
          %v998 = vld [vmem:[#allocation2 + $0x40] sm:$0xff]
          %v999 = vld [vmem:[#allocation2 + $0x48] sm:$0xff]
          %v1000 = vld [vmem:[#allocation2 + $0x50] sm:$0xff]
          %v1001 = vld [vmem:[#allocation2 + $0x58] sm:$0xff]
          %v1002 = vld [vmem:[#allocation2 + $0x60] sm:$0xff]
          %v1003 = vld [vmem:[#allocation2 + $0x68] sm:$0xff]
          %v1004 = vld [vmem:[#allocation2 + $0x70] sm:$0xff]
          %v1005 = vld [vmem:[#allocation2 + $0x78] sm:$0xff]
          %v1006 = vld [vmem:[%s3] sm:$0x1]
          %v1008 = vlaneseq
          %v1009 = vshrl.u32 %v1008, 7
          %v1010 = vsub.s32 0, %v1009
          %v1011 = vrot.slane %v1006, %v1010
          %v1013 = vadd.f32 %v990, %v1011
          %v1014 = vadd.f32 %v991, %v1011
          %v1015 = vadd.f32 %v992, %v1011
          %v1016 = vadd.f32 %v993, %v1011
          %v1017 = vadd.f32 %v994, %v1011
          %v1018 = vadd.f32 %v995, %v1011
          %v1019 = vadd.f32 %v996, %v1011
          %v1020 = vadd.f32 %v997, %v1011
          %v1021 = vadd.f32 %v998, %v1011
          %v1022 = vadd.f32 %v999, %v1011
          %v1023 = vadd.f32 %v1000, %v1011
          %v1024 = vadd.f32 %v1001, %v1011
          %v1025 = vadd.f32 %v1002, %v1011
          %v1026 = vadd.f32 %v1003, %v1011
          %v1027 = vadd.f32 %v1004, %v1011
          %v1028 = vadd.f32 %v1005, %v1011
          %v1029 = vstv %s989
          %v1030 = vmul.f32 %v1013, %v1029
          %v1031 = vmul.f32 %v1014, %v1029
          %v1032 = vmul.f32 %v1015, %v1029
          %v1033 = vmul.f32 %v1016, %v1029
          %v1034 = vmul.f32 %v1017, %v1029
          %v1035 = vmul.f32 %v1018, %v1029
          %v1036 = vmul.f32 %v1019, %v1029
          %v1037 = vmul.f32 %v1020, %v1029
          %v1038 = vmul.f32 %v1021, %v1029
          %v1039 = vmul.f32 %v1022, %v1029
          %v1040 = vmul.f32 %v1023, %v1029
          %v1041 = vmul.f32 %v1024, %v1029
          %v1042 = vmul.f32 %v1025, %v1029
          %v1043 = vmul.f32 %v1026, %v1029
          %v1044 = vmul.f32 %v1027, %v1029
          %v1045 = vmul.f32 %v1028, %v1029
          %1046 = vst [vmem:[#allocation9] sm:$0xff] %v1030
          %1047 = vst [vmem:[#allocation9 + $0x8] sm:$0xff] %v1031
          %1048 = vst [vmem:[#allocation9 + $0x10] sm:$0xff] %v1032
          %1049 = vst [vmem:[#allocation9 + $0x18] sm:$0xff] %v1033
          %1050 = vst [vmem:[#allocation9 + $0x20] sm:$0xff] %v1034
          %1051 = vst [vmem:[#allocation9 + $0x28] sm:$0xff] %v1035
          %1052 = vst [vmem:[#allocation9 + $0x30] sm:$0xff] %v1036
          %1053 = vst [vmem:[#allocation9 + $0x38] sm:$0xff] %v1037
          %1054 = vst [vmem:[#allocation9 + $0x40] sm:$0xff] %v1038
          %1055 = vst [vmem:[#allocation9 + $0x48] sm:$0xff] %v1039
          %1056 = vst [vmem:[#allocation9 + $0x50] sm:$0xff] %v1040
          %1057 = vst [vmem:[#allocation9 + $0x58] sm:$0xff] %v1041
          %1058 = vst [vmem:[#allocation9 + $0x60] sm:$0xff] %v1042
          %1059 = vst [vmem:[#allocation9 + $0x68] sm:$0xff] %v1043
          %1060 = vst [vmem:[#allocation9 + $0x70] sm:$0xff] %v1044
          %1061 = vst [vmem:[#allocation9 + $0x78] sm:$0xff] %v1045
        $region52: #{tpu_custom_call.1} parent=35 // pred_fallthru
          _
        // Predicated region
        $region53: #{tpu_custom_call.1} parent=35 // pred_check
          %p1062 = pneg %p149
        $region54: #{tpu_custom_call.1} parent=35 // pred_check_branch
          %1064 = sbr.rel (%p1062) target = $region56
        $region55: #{tpu_custom_call.1} parent=35 // pred_region
          %s1065 = smul.u32 16, %s27
          %s1067 = ssub.s32 2048, 2048
          %1068 = vsyncadd [#allocation6], %s1067
          %s1069 = smul.addr %s1065, 128
          %s1070 = scalar_lea.hbm %s4, %s1069
          %s1071 = sshll.u32 [#allocation9], 4
          %s1072 = int_to_ptr.vmem [resolvable:$true] %s1071
          %1077 = dma.vmem_to_hbm [thread:$0]  %s1072, 2048, %s1070, [#allocation6], 128, 128, 8
        $region56: #{tpu_custom_call.1} parent=35 // pred_fallthru
          _
        // Predicated region
        $region57: #{tpu_custom_call.1} parent=35 // pred_check
          %p1078 = pneg %p149
        $region58: #{tpu_custom_call.1} parent=35 // pred_check_branch
          %1080 = sbr.rel (%p1078) target = $region60
        $region59: #{tpu_custom_call.1} parent=35 // pred_region
          %1081 = dma.done [#allocation6], 2048
        $region60: #{tpu_custom_call.1} parent=35 // pred_fallthru
          _
      $region36: #{tpu_custom_call.1} parent=5 // pred_fallthru
        _
      %p1082 = scmp.le.s32.totalorder 2, %s18
      // Predicated region
      $region61: #{tpu_custom_call.1} parent=5 // pred_check
        %p1083 = pneg %p1082
      $region62: #{tpu_custom_call.1} parent=5 // pred_check_branch
        %1085 = sbr.rel (%p1083) target = $region64
      $region63: #{tpu_custom_call.1} parent=5 // pred_region
        %s1086 = ssub.s32 %s18, 2
      $region64: #{tpu_custom_call.1} parent=5 // pred_fallthru
        _
    $region6: #{tpu_custom_call.1} parent=1 // loop_footer
      %s22 = sadd.s32 1, %s18
    $region7: #{tpu_custom_call.1} parent=1 // loop_footer_branch
      %17 = sbr.rel target = $region3
    $region8: #{tpu_custom_call.1} parent=1 // loop_exit
      _
    %1087 = vsyncpa [#allocation5], 1
    %s1088 = scalar_lea.sflag [#allocation5], 1
    %1089 = vsyncpa %s1088, 1
    %1090 = vsyncpa [#allocation8], 1
    %s1091 = scalar_lea.sflag [#allocation8], 1
    %1092 = vsyncpa %s1091, 1
    %1093 = vsyncpa [#allocation6], 1
    %s1094 = scalar_lea.sflag [#allocation6], 1
    %1095 = vsyncpa %s1094, 1

</llo_original>
